<compile_context>
chip_gen: v6e
topology: v6e:2x2x1
jax: 0.10.0
libtpu: 0.0.40
codegen_flags: <defaults>
</compile_context>

<pallas_src>
import jax
import jax.numpy as jnp
from jax.experimental import pallas as pl
from jax.experimental.pallas import tpu as pltpu

# Below this size a Pallas launch is not worth it; use a plain XLA copy.
_DEFAULT_SMALL_COPY_THRESHOLD_BYTES = 1 << 20  # 1 MiB
# Keep a handful of DMAs in flight so the HBM controller stays busy.
_MAX_INFLIGHT_DMAS = 4
# Arrays smaller than this are copied with a single DMA (no point chunking).
_MIN_BYTES_FOR_CHUNKING = 1 << 20  # 1 MiB


def identity_map(x, *args, **kwargs):
    """Faithful IdentityMap.forward(x) -> x: metadata no-op, zero HBM traffic."""
    return x


def _pick_chunks(leading, total_bytes):
    """Static (start, size) chunks along axis 0 for concurrent HBM->HBM DMAs."""
    if leading <= 1 or total_bytes < _MIN_BYTES_FOR_CHUNKING:
        return ((0, leading),)
    n = min(_MAX_INFLIGHT_DMAS, leading)
    per = pl.cdiv(leading, n)
    chunks = []
    start = 0
    while start < leading:
        size = min(per, leading - start)
        chunks.append((start, size))
        start += size
    return tuple(chunks)


def _make_hbm_copy_kernel(chunks):
    """Kernel: start all chunked HBM->HBM DMAs, then wait on all of them."""

    def kernel(x_hbm, o_hbm, sem):
        copies = []
        for i, (start, size) in enumerate(chunks):
            # NOTE: source and destination slices are identical (same start,
            # same size) and the chunks are disjoint, so the copies are
            # trivially race-free and may all be in flight concurrently.
            cp = pltpu.make_async_copy(
                x_hbm.at[pl.ds(start, size)],
                o_hbm.at[pl.ds(start, size)],
                sem.at[i],
            )
            cp.start()
            copies.append(cp)
        for cp in copies:
            cp.wait()

    return kernel


def _hbm_to_hbm_copy(x):
    """Materialized copy of `x` into a fresh HBM buffer via direct DMA."""
    total_bytes = x.size * x.dtype.itemsize
    chunks = _pick_chunks(x.shape[0], total_bytes)

    return pl.pallas_call(
        _make_hbm_copy_kernel(chunks),
        out_shape=jax.ShapeDtypeStruct(x.shape, x.dtype),
        # Both operands stay in HBM: no BlockSpec tiling, no VMEM staging.
        in_specs=[pl.BlockSpec(memory_space=pl.ANY)],
        out_specs=pl.BlockSpec(memory_space=pl.ANY),
        scratch_shapes=[pltpu.SemaphoreType.DMA((len(chunks),))],
        compiler_params=pltpu.CompilerParams(
            has_side_effects=True,
        ),
        # Pure memory traffic: read N + write N bytes, zero flops.
        cost_estimate=pl.CostEstimate(
            flops=0,
            transcendentals=0,
            bytes_accessed=2 * total_bytes,
        ),
    )(x)


def identity_map_pallas(
    x,
    *args,
    small_copy_threshold_bytes=_DEFAULT_SMALL_COPY_THRESHOLD_BYTES,
    **kwargs,
):
    """IdentityMap.forward(x) -> x, materialized into a fresh buffer via Pallas.

    The fastest implementation of the forward remains `identity_map` (return x,
    no copy at all). Use this only when a second, physically distinct HBM buffer
    with the same contents is genuinely required. Small inputs fall back to a
    plain XLA copy (set small_copy_threshold_bytes=0 to force the kernel).
    """
    if x.ndim == 0 or x.size == 0:
        return x  # nothing worth streaming

    total_bytes = x.size * x.dtype.itemsize
    if total_bytes < small_copy_threshold_bytes:
        # Kernel launch overhead dominates tiny copies; XLA's native copy is
        # already at roofline for small arrays.
        return jnp.copy(x)

    return _hbm_to_hbm_copy(x)


if __name__ == "__main__":
    key = jax.random.PRNGKey(0)

    # (batch, seq, hidden) — typical multimodal-projector input.
    B, S, H = 2, 8, 32
    x = jax.random.normal(key, (B, S, H), dtype=jnp.float32)

    # Faithful forward: identity is a metadata no-op (same array, zero traffic).
    assert identity_map(x) is x

    # Pallas HBM->HBM DMA copy (force the kernel even for this small input).
    y = identity_map_pallas(x, small_copy_threshold_bytes=0)
    jax.block_until_ready(y)
    assert y.shape == x.shape and y.dtype == x.dtype
    assert bool(jnp.array_equal(y, x))

    # Odd / lane-ragged shape and sub-32-bit dtype: whole-ref DMA handles it
    # without any (8,128) tiling constraint.
    x_odd = jax.random.normal(key, (3, 5, 30), dtype=jnp.bfloat16)
    y_odd = identity_map_pallas(x_odd, small_copy_threshold_bytes=0)
    jax.block_until_ready(y_odd)
    assert y_odd.shape == x_odd.shape and y_odd.dtype == x_odd.dtype
    assert bool(jnp.array_equal(y_odd, x_odd))

    # Larger input (> 1 MiB): multiple concurrent DMA chunks along the leading
    # axis, and the default (non-forced) entry path picks the kernel.
    x_big = jax.random.normal(key, (4, 660, 512), dtype=jnp.float32)
    y_big = identity_map_pallas(x_big)
    jax.block_until_ready(y_big)
    assert bool(jnp.array_equal(y_big, x_big))

    print("KERNEL_OK")
</pallas_src>

<mosaic_0001>
module attributes {stable_mosaic.version = 11 : i64} {
  func.func @kernel(%arg0: memref<2x8x32xf32, #tpu.memory_space<any>>, %arg1: memref<2x8x32xf32, #tpu.memory_space<any>>, %arg2: memref<1x!tpu.dma_semaphore, #tpu.memory_space<semaphore_mem>>) attributes {dimension_semantics = [], scalar_prefetch = 0 : i64, scratch_operands = 1 : i64, tpu.core_type = #tpu.core_type<tc>} {
    %c0_i32 = arith.constant 0 : i32
    %c0_i32_0 = arith.constant 0 : i32
    %c0_i32_1 = arith.constant 0 : i32
    %c0_i32_2 = arith.constant 0 : i32
    %0 = tpu.memref_slice %arg0[%c0_i32_0, %c0_i32_1, %c0_i32_2] : memref<2x8x32xf32, #tpu.memory_space<any>> -> memref<2x8x32xf32, #tpu.memory_space<any>>
    %c0_i32_3 = arith.constant 0 : i32
    %c0_i32_4 = arith.constant 0 : i32
    %c0_i32_5 = arith.constant 0 : i32
    %1 = tpu.memref_slice %arg1[%c0_i32_3, %c0_i32_4, %c0_i32_5] : memref<2x8x32xf32, #tpu.memory_space<any>> -> memref<2x8x32xf32, #tpu.memory_space<any>>
    %2 = tpu.memref_slice %arg2[%c0_i32] : memref<1x!tpu.dma_semaphore, #tpu.memory_space<semaphore_mem>> -> memref<1x!tpu.dma_semaphore, #tpu.memory_space<semaphore_mem>>
    %3 = tpu.memref_squeeze %2 : memref<1x!tpu.dma_semaphore, #tpu.memory_space<semaphore_mem>> -> memref<!tpu.dma_semaphore, #tpu.memory_space<semaphore_mem>>
    tpu.enqueue_dma source(%0 : memref<2x8x32xf32, #tpu.memory_space<any>>) target(%1 : memref<2x8x32xf32, #tpu.memory_space<any>>) target_semaphore(%3 : memref<!tpu.dma_semaphore, #tpu.memory_space<semaphore_mem>>)
    %c0_i32_6 = arith.constant 0 : i32
    %c0_i32_7 = arith.constant 0 : i32
    %c0_i32_8 = arith.constant 0 : i32
    %c0_i32_9 = arith.constant 0 : i32
    %4 = tpu.memref_slice %arg0[%c0_i32_7, %c0_i32_8, %c0_i32_9] : memref<2x8x32xf32, #tpu.memory_space<any>> -> memref<2x8x32xf32, #tpu.memory_space<any>>
    %c0_i32_10 = arith.constant 0 : i32
    %c0_i32_11 = arith.constant 0 : i32
    %c0_i32_12 = arith.constant 0 : i32
    %5 = tpu.memref_slice %arg1[%c0_i32_10, %c0_i32_11, %c0_i32_12] : memref<2x8x32xf32, #tpu.memory_space<any>> -> memref<2x8x32xf32, #tpu.memory_space<any>>
    %6 = tpu.memref_slice %arg2[%c0_i32_6] : memref<1x!tpu.dma_semaphore, #tpu.memory_space<semaphore_mem>> -> memref<1x!tpu.dma_semaphore, #tpu.memory_space<semaphore_mem>>
    %7 = tpu.memref_squeeze %6 : memref<1x!tpu.dma_semaphore, #tpu.memory_space<semaphore_mem>> -> memref<!tpu.dma_semaphore, #tpu.memory_space<semaphore_mem>>
    tpu.wait_dma2 semaphore(%7 : memref<!tpu.dma_semaphore, #tpu.memory_space<semaphore_mem>>) src(%4 : memref<2x8x32xf32, #tpu.memory_space<any>>) dst(%5 : memref<2x8x32xf32, #tpu.memory_space<any>>)
    return
  }
}

</mosaic_0001>

<llo_original>
// kernel: tpu_custom_call.1
$region0: #{tpu_custom_call.1}
  #allocation0 [shape = 'u32[]', space=smem, size = 0x4, offset = 0x4, fixed_abs, tag = 'smem constant byte address 0x4 - core index']
  #allocation1 [shape = 'u32[144,128]{1,0:T(1,128)}', space=vmem, size = 0x12000, scoped, tag = 'internal scratch']
  #allocation2 [shape = 's32[1]{0}', space=sflag, size = 0x4, scoped, tag = 'scratch operand']
  #allocation3 [shape = 's32[]', space=sflag, size = 0x4, offset = 0, fixed_abs, tag = 'sflag constant byte address 0x0 - dummy sync flag']
  #allocation4 [shape = 'u32[0]{0}', space=smem, size = 0, offset = 0, fixed_abs, tag = 'smem constant byte address 0x0 - null']
  %s0 = inlined_call_operand.hbm [shape: f32[2,8,32], index: 0, kind: input, shape index: {}]
  %s1 = inlined_call_operand.hbm [shape: f32[2,8,32], index: 1, kind: output, shape index: {}]
  %s2 = sld [smem:[#allocation0]]
  $region2: #{tpu_custom_call.1} parent=0
    _
  %s4 = ssub.s32 1, %s2
  %s5 = scalar_select 0, %s4, %s2
  %s7 = sshll.u32 1, 14
  %s8 = sxor.u32 4294967295, %s7
  %12 = dma.general %s0, 256, %s1, [#allocation2], 131072, [#allocation4], 0, 0
  %s13 = smul.u32 2, 8
  %s14 = smul.u32 %s13, 1
  %s15 = sshll.u32 %s14, 4
  %16 = dma.done [#allocation2], %s15
  %17 = vsyncmov [#allocation2]
  %s18 = vpop.sfrf %17
  %p19 = scmp.eq.s32.totalorder %s18, 0
  %p20 = pneg %p19
  %22 = shalt.err (%p20)

</llo_original>
